<compile_context>
chip_gen: v6e
topology: v6e:2x2x1
jax: 0.10.0
libtpu: 0.0.40
codegen_flags: <defaults>
</compile_context>

<pallas_src>
import functools

import jax
import jax.numpy as jnp
import numpy as np
from jax import lax
from jax.experimental import pallas as pl
from jax.experimental.pallas import tpu as pltpu

EPS = 1e-15


def _round_up(x, m):
    return ((x + m - 1) // m) * m


def _tpu_generation():
    """Coarse chip-generation detection for per-generation tiling / VMEM budgets."""
    try:
        kind = jax.devices()[0].device_kind.lower()
    except Exception:  # defensive: never fail kernel construction on this
        return "unknown"
    if "v7" in kind or "7x" in kind:
        return "v7x"
    if "v6" in kind:
        return "v6e"
    if "v5e" in kind or "v5 lite" in kind or "v5lite" in kind:
        return "v5e"
    return "unknown"


# generation -> (vmem_limit_bytes, vmem_budget_bytes for tiling,
#                input pipeline buffer count, dual TensorCore?)
_GEN_CONFIG = {
    # v7x: 64 MiB physical VMEM / 32 MiB scoped default; 2 TensorCores/chip.
    "v7x": (32 * 2 ** 20, 24 * 2 ** 20, 2, True),
    # v6e: 128 MiB physical VMEM; single TensorCore -> raise the scoped limit.
    "v6e": (80 * 2 ** 20, 64 * 2 ** 20, 2, False),
    # v5e: 128 MiB physical (16 MiB scoped default); deeper buffering hides
    # DMA jitter on the slower HBM.
    "v5e": (64 * 2 ** 20, 48 * 2 ** 20, 3, False),
    # Anything else: stay conservative and keep the default scoped limit.
    "unknown": (None, 12 * 2 ** 20, 2, False),
}


def _recon_loss_kernel(*refs, e_pos, e_neg, tile_e, mode, accumulate):
    """One edge tile: sum_e w_e * (-log(sigmoid(sign_e * v_e) + EPS)).

    v_e    = <s_e, t_e>                      (mode 0)
           = <s_e, t_e> + ||tv_e||^2         (mode 1: concat identity)
           = <s_e + tv_e, t_e + tv_e>        (mode 2: additive time vector)
    sign_e = +1 for positive edges, -1 for negative edges
             (sigmoid(-v) == 1 - sigmoid(v), numerically stable).
    w_e    = 1/E_pos for positive edges, 1/E_neg for negative edges,
             0 for rows past the end of the edge list (grid tail padding).
    """
    if mode == 0:
        s_ref, t_ref, out_ref = refs
        tv_ref = None
    else:
        s_ref, t_ref, tv_ref, out_ref = refs

    i = pl.program_id(0)
    s = s_ref[...].astype(jnp.float32)                   # (tile_e, F)
    t = t_ref[...].astype(jnp.float32)

    if mode == 2:
        tv = tv_ref[...].astype(jnp.float32)
        s = s + tv
        t = t + tv

    v = jnp.sum(s * t, axis=1, keepdims=True)            # (tile_e, 1)

    if mode == 1:
        tv = tv_ref[...].astype(jnp.float32)
        v = v + jnp.sum(tv * tv, axis=1, keepdims=True)  # <[s,tv],[t,tv]>

    row = i * tile_e + lax.broadcasted_iota(jnp.int32, (tile_e, 1), 0)
    is_pos = row < e_pos
    valid = row < (e_pos + e_neg)

    # Rows past the end of the edge list hold unspecified data; neutralize
    # them before the transcendentals so no NaN/Inf can leak into the sum.
    v = jnp.where(valid, v, 0.0)

    # Negative edges: use sigmoid(-v) == 1 - sigmoid(v) (no cancellation).
    x = jnp.where(is_pos, v, -v)
    ex = jnp.exp(-jnp.abs(x))                            # in (0, 1], no overflow
    p = jnp.where(x >= 0, 1.0 / (1.0 + ex), ex / (1.0 + ex))
    term = -jnp.log(p + EPS)

    inv_pos = 1.0 / max(e_pos, 1)
    inv_neg = 1.0 / max(e_neg, 1)
    w = jnp.where(is_pos, inv_pos, inv_neg)
    w = jnp.where(valid, w, 0.0)

    partial = jnp.sum(term * w)

    if accumulate:
        # Resident accumulator output block (single-TC chips, "arbitrary" grid).
        @pl.when(i == 0)
        def _():
            out_ref[...] = jnp.zeros_like(out_ref)

        out_ref[...] = out_ref[...] + partial
    else:
        # Lane-dense per-tile partial (dual-TC v7x, "parallel" grid).
        out_ref[...] = jnp.full(out_ref.shape, partial, dtype=jnp.float32)


def _pick_tile_e(e_total, streams, *, vmem_budget_bytes, n_buffers=2,
                 max_tile=1 << 16):
    """Edge-tile rows (multiple of 8).

    VMEM footprint per row:
      * each input stream is 128-lane padded in VMEM at its native dtype and
        the pipeline keeps `n_buffers` copies of it;
      * plus headroom for ~3 tile-sized f32 temporaries (up-casts + product).
    """
    stream_row_bytes = sum(
        n_buffers * _round_up(w, 128) * np.dtype(dt).itemsize
        for w, dt in streams)
    temp_row_bytes = 3 * _round_up(max(w for w, _ in streams), 128) * 4
    bytes_per_row = stream_row_bytes + temp_row_bytes
    te = int(vmem_budget_bytes // bytes_per_row)
    te = max(8, min(te, max_tile))
    te = max(8, (te // 8) * 8)
    return min(te, _round_up(e_total, 8))


def _fused_loss(s, t, tv, e_pos, e_neg, mode, *, tile_e=None):
    """Pipelined, edge-tiled pallas_call over the concatenated pos+neg edges."""
    e_total, f = s.shape
    assert e_total == e_pos + e_neg

    gen = _tpu_generation()
    vmem_limit, vmem_budget, n_buffers, dual_tc = _GEN_CONFIG[gen]

    streams = [(f, s.dtype), (f, t.dtype)]
    if mode in (1, 2):
        streams.append((int(tv.shape[1]), tv.dtype))

    if tile_e is None:
        tile_e = _pick_tile_e(e_total, streams,
                              vmem_budget_bytes=vmem_budget,
                              n_buffers=n_buffers)
    g = int(pl.cdiv(e_total, tile_e))

    def _spec(width):
        if n_buffers != 2:
            try:
                return pl.BlockSpec((tile_e, width), lambda i: (i, 0),
                                    pipeline_mode=pl.Buffered(n_buffers))
            except TypeError:  # older BlockSpec without pipeline_mode
                pass
        return pl.BlockSpec((tile_e, width), lambda i: (i, 0))

    in_specs = [_spec(w) for w, _ in streams]
    inputs = (s, t) if mode == 0 else (s, t, tv)

    kernel = functools.partial(_recon_loss_kernel, e_pos=e_pos, e_neg=e_neg,
                               tile_e=tile_e, mode=mode,
                               accumulate=not dual_tc)

    if dual_tc:
        # v7x: per-tile lane-dense partials; edge tiles shard across the 2 TCs.
        partials = pl.pallas_call(
            kernel,
            out_shape=jax.ShapeDtypeStruct((g, 1, 128), jnp.float32),
            grid=(g,),
            in_specs=in_specs,
            out_specs=pl.BlockSpec((1, 1, 128), lambda i: (i, 0, 0)),
            compiler_params=pltpu.CompilerParams(
                dimension_semantics=("parallel",),
                vmem_limit_bytes=vmem_limit),
        )(*inputs)
        return jnp.sum(partials[:, 0, 0])

    # v5e / v6e / unknown: resident accumulator output block, no partials
    # writeback and no follow-up reduction pass.
    out = pl.pallas_call(
        kernel,
        out_shape=jax.ShapeDtypeStruct((1, 128), jnp.float32),
        grid=(g,),
        in_specs=in_specs,
        out_specs=pl.BlockSpec((1, 128), lambda i: (0, 0)),
        compiler_params=pltpu.CompilerParams(
            dimension_semantics=("arbitrary",),
            vmem_limit_bytes=vmem_limit),
    )(*inputs)
    return out[0, 0]


def recon_loss(z, pos_edge_index, neg_edge_index, time_vector_flag,
               pos_time_vector, neg_time_vector, *, tile_e=None):
    """Forward pass of ReconLoss: pos_loss + neg_loss (scalar f32)."""
    e_pos = int(pos_edge_index.shape[1])
    e_neg = int(neg_edge_index.shape[1])
    if e_pos == 0 or e_neg == 0:
        # torch's .mean() over an empty edge set is NaN; preserve that instead
        # of raising ZeroDivisionError at trace time.
        return jnp.float32(float("nan"))

    edge_index = jnp.concatenate([pos_edge_index, neg_edge_index], axis=1)
    # Gather endpoint embeddings in z's NATIVE dtype (no wrapper-side f32 cast);
    # the kernel up-casts per tile.
    s = z[edge_index[0]]
    t = z[edge_index[1]]
    # TODO(synk): fuse this gather into the kernel (z resident in VMEM +
    # scalar-prefetched edge_index) to drop the XLA-materialized s/t entirely.

    mode = time_vector_flag if time_vector_flag in (1, 2) else 0
    tv = None
    if mode:
        tv = jnp.concatenate([pos_time_vector, neg_time_vector], axis=0)
    return _fused_loss(s, t, tv, e_pos, e_neg, mode, tile_e=tile_e)


def _recon_loss_ref(z, pos_edge_index, neg_edge_index, time_vector_flag,
                    pos_time_vector, neg_time_vector):
    """Pure-JAX reference mirroring the PyTorch module (neg term uses the
    numerically-stable identity 1 - sigmoid(v) == sigmoid(-v))."""
    def feats(edge_index, tv):
        s = z[edge_index[0]]
        t = z[edge_index[1]]
        if time_vector_flag == 1:
            s = jnp.concatenate([s, tv], axis=1)
            t = jnp.concatenate([t, tv], axis=1)
        elif time_vector_flag == 2:
            s = s + tv
            t = t + tv
        return jnp.sum(s.astype(jnp.float32) * t.astype(jnp.float32), axis=1)

    vp = feats(pos_edge_index, pos_time_vector)
    vn = feats(neg_edge_index, neg_time_vector)
    pos_loss = -jnp.log(jax.nn.sigmoid(vp) + EPS).mean()
    neg_loss = -jnp.log(jax.nn.sigmoid(-vn) + EPS).mean()
    return pos_loss + neg_loss


if __name__ == "__main__":
    key = jax.random.PRNGKey(0)
    k1, k2, k3, k4, k5, k6, k7 = jax.random.split(key, 7)

    N, D, T = 16, 32, 16          # nodes, embedding dim, time-vector dim
    E_POS, E_NEG = 8, 8           # number of positive / negative edges

    z = jax.random.normal(k1, (N, D), jnp.float32)
    pos_edge_index = jax.random.randint(k2, (2, E_POS), 0, N, dtype=jnp.int32)
    neg_edge_index = jax.random.randint(k3, (2, E_NEG), 0, N, dtype=jnp.int32)
    # flag == 1 concatenates an (E, T) time vector; flag == 2 adds an (E, D) one.
    pos_tv_cat = jax.random.normal(k4, (E_POS, T), jnp.float32)
    neg_tv_cat = jax.random.normal(k5, (E_NEG, T), jnp.float32)
    pos_tv_add = jax.random.normal(k6, (E_POS, D), jnp.float32)
    neg_tv_add = jax.random.normal(k7, (E_NEG, D), jnp.float32)

    loss_fn = jax.jit(recon_loss, static_argnums=(3,))

    cases = [
        (z, 1, pos_tv_cat, neg_tv_cat, 1e-4),              # concat time vector
        (z, 2, pos_tv_add, neg_tv_add, 1e-4),              # add time vector
        (z, 0, pos_tv_cat, neg_tv_cat, 1e-4),              # no time vector
        (z.astype(jnp.bfloat16), 0, pos_tv_cat, neg_tv_cat, 1e-3),  # native bf16
    ]
    for zz, flag, ptv, ntv, tol in cases:
        loss = loss_fn(zz, pos_edge_index, neg_edge_index, flag, ptv, ntv)
        loss = jax.block_until_ready(loss)
        ref = _recon_loss_ref(zz, pos_edge_index, neg_edge_index, flag, ptv, ntv)
        np.testing.assert_allclose(np.asarray(loss), np.asarray(ref),
                                   rtol=tol, atol=tol)
    print("KERNEL_OK")
</pallas_src>

<mosaic_0001>
module attributes {stable_mosaic.version = 11 : i64} {
  func.func @_recon_loss_kernel(%arg0: i32, %arg1: memref<16x32xf32, #tpu.memory_space<vmem>>, %arg2: memref<16x32xf32, #tpu.memory_space<vmem>>, %arg3: memref<16x16xf32, #tpu.memory_space<vmem>>, %arg4: memref<1x128xf32, #tpu.memory_space<vmem>>) attributes {dimension_semantics = [#tpu.dimension_semantics<arbitrary>], iteration_bounds = array<i64: 1>, scalar_prefetch = 0 : i64, scratch_operands = 0 : i64, tpu.core_type = #tpu.core_type<tc>, window_params = [{transform_indices = @transform_0, window_bounds = array<i64: 16, 32>}, {transform_indices = @transform_1, window_bounds = array<i64: 16, 32>}, {transform_indices = @transform_2, window_bounds = array<i64: 16, 16>}, {pipeline_mode = #tpu.pipeline_mode<synchronous>, transform_indices = @transform_3, window_bounds = array<i64: 1, 128>}]} {
    %c0 = arith.constant 0 : index
    %c0_0 = arith.constant 0 : index
    %0 = vector.load %arg1[%c0, %c0_0] : memref<16x32xf32, #tpu.memory_space<vmem>>, vector<16x32xf32>
    %c0_1 = arith.constant 0 : index
    %c0_2 = arith.constant 0 : index
    %1 = vector.load %arg2[%c0_1, %c0_2] : memref<16x32xf32, #tpu.memory_space<vmem>>, vector<16x32xf32>
    %2 = arith.mulf %0, %1 : vector<16x32xf32>
    %cst = arith.constant dense<0.000000e+00> : vector<16xf32>
    %3 = vector.multi_reduction <add>, %2, %cst [1] : vector<16x32xf32> to vector<16xf32>
    %4 = vector.shape_cast %3 : vector<16xf32> to vector<16x1xf32>
    %c0_3 = arith.constant 0 : index
    %c0_4 = arith.constant 0 : index
    %5 = vector.load %arg3[%c0_3, %c0_4] : memref<16x16xf32, #tpu.memory_space<vmem>>, vector<16x16xf32>
    %6 = arith.mulf %5, %5 : vector<16x16xf32>
    %cst_5 = arith.constant dense<0.000000e+00> : vector<16xf32>
    %7 = vector.multi_reduction <add>, %6, %cst_5 [1] : vector<16x16xf32> to vector<16xf32>
    %8 = vector.shape_cast %7 : vector<16xf32> to vector<16x1xf32>
    %9 = arith.addf %4, %8 : vector<16x1xf32>
    %c16_i32 = arith.constant 16 : i32
    %10 = arith.muli %arg0, %c16_i32 : i32
    %11 = tpu.iota {dimensions = array<i32: 0>} : vector<16x1xi32>
    %12 = vector.broadcast %10 : i32 to vector<16x1xi32>
    %13 = arith.addi %12, %11 : vector<16x1xi32>
    %c8_i32 = arith.constant 8 : i32
    %14 = vector.broadcast %c8_i32 : i32 to vector<16x1xi32>
    %15 = arith.cmpi slt, %13, %14 : vector<16x1xi32>
    %c16_i32_6 = arith.constant 16 : i32
    %16 = vector.broadcast %c16_i32_6 : i32 to vector<16x1xi32>
    %17 = arith.cmpi slt, %13, %16 : vector<16x1xi32>
    %cst_7 = arith.constant 0.000000e+00 : f32
    %18 = vector.broadcast %cst_7 : f32 to vector<16x1xf32>
    %19 = arith.select %17, %9, %18 : vector<16x1xi1>, vector<16x1xf32>
    %cst_8 = arith.constant 0.000000e+00 : f32
    %20 = vector.broadcast %cst_8 : f32 to vector<16x1xf32>
    %21 = arith.subf %20, %19 : vector<16x1xf32>
    %22 = arith.select %15, %19, %21 : vector<16x1xi1>, vector<16x1xf32>
    %23 = math.absf %22 : vector<16x1xf32>
    %cst_9 = arith.constant 0.000000e+00 : f32
    %24 = vector.broadcast %cst_9 : f32 to vector<16x1xf32>
    %25 = arith.subf %24, %23 : vector<16x1xf32>
    %26 = math.exp %25 : vector<16x1xf32>
    %cst_10 = arith.constant 0.000000e+00 : f32
    %27 = vector.broadcast %cst_10 : f32 to vector<16x1xf32>
    %28 = arith.cmpf oge, %22, %27 : vector<16x1xf32>
    %cst_11 = arith.constant 1.000000e+00 : f32
    %29 = vector.broadcast %cst_11 : f32 to vector<16x1xf32>
    %30 = arith.addf %29, %26 : vector<16x1xf32>
    %cst_12 = arith.constant 1.000000e+00 : f32
    %31 = vector.broadcast %cst_12 : f32 to vector<16x1xf32>
    %32 = arith.divf %31, %30 : vector<16x1xf32>
    %cst_13 = arith.constant 1.000000e+00 : f32
    %33 = vector.broadcast %cst_13 : f32 to vector<16x1xf32>
    %34 = arith.addf %33, %26 : vector<16x1xf32>
    %35 = arith.divf %26, %34 : vector<16x1xf32>
    %36 = arith.select %28, %32, %35 : vector<16x1xi1>, vector<16x1xf32>
    %cst_14 = arith.constant 1.000000e-15 : f32
    %37 = vector.broadcast %cst_14 : f32 to vector<16x1xf32>
    %38 = arith.addf %36, %37 : vector<16x1xf32>
    %39 = math.log %38 : vector<16x1xf32>
    %cst_15 = arith.constant 0.000000e+00 : f32
    %40 = vector.broadcast %cst_15 : f32 to vector<16x1xf32>
    %41 = arith.subf %40, %39 : vector<16x1xf32>
    %cst_16 = arith.constant 1.250000e-01 : f32
    %cst_17 = arith.constant 1.250000e-01 : f32
    %42 = vector.broadcast %cst_16 : f32 to vector<16x1xf32>
    %43 = vector.broadcast %cst_17 : f32 to vector<16x1xf32>
    %44 = arith.select %15, %42, %43 : vector<16x1xi1>, vector<16x1xf32>
    %cst_18 = arith.constant 0.000000e+00 : f32
    %45 = vector.broadcast %cst_18 : f32 to vector<16x1xf32>
    %46 = arith.select %17, %44, %45 : vector<16x1xi1>, vector<16x1xf32>
    %47 = arith.mulf %41, %46 : vector<16x1xf32>
    %48 = vector.shape_cast %47 : vector<16x1xf32> to vector<1x16x1xf32>
    %cst_19 = arith.constant dense<0.000000e+00> : vector<1xf32>
    %49 = vector.multi_reduction <add>, %48, %cst_19 [1, 2] : vector<1x16x1xf32> to vector<1xf32>
    %50 = vector.shape_cast %49 : vector<1xf32> to vector<1x1x1xf32>
    %51 = vector.extract %50[0, 0, 0] : f32 from vector<1x1x1xf32>
    %c0_i32 = arith.constant 0 : i32
    %52 = arith.cmpi eq, %arg0, %c0_i32 : i32
    %53 = arith.extui %52 : i1 to i32
    %c0_i32_20 = arith.constant 0 : i32
    %54 = arith.cmpi ne, %53, %c0_i32_20 : i32
    scf.if %54 {
      %cst_25 = arith.constant 0.000000e+00 : f32
      %59 = vector.broadcast %cst_25 : f32 to vector<1x128xf32>
      %c0_26 = arith.constant 0 : index
      %c0_27 = arith.constant 0 : index
      %60 = vector.load %arg4[%c0_26, %c0_27] : memref<1x128xf32, #tpu.memory_space<vmem>>, vector<1x128xf32>
      tpu.vector_store %arg4[%c0_26, %c0_27], %59 {strides = array<i32>} : memref<1x128xf32, #tpu.memory_space<vmem>>, vector<1x128xf32>,
    } else {
    }
    %c0_21 = arith.constant 0 : index
    %c0_22 = arith.constant 0 : index
    %55 = vector.load %arg4[%c0_21, %c0_22] : memref<1x128xf32, #tpu.memory_space<vmem>>, vector<1x128xf32>
    %56 = vector.broadcast %51 : f32 to vector<1x128xf32>
    %57 = arith.addf %55, %56 : vector<1x128xf32>
    %c0_23 = arith.constant 0 : index
    %c0_24 = arith.constant 0 : index
    %58 = vector.load %arg4[%c0_23, %c0_24] : memref<1x128xf32, #tpu.memory_space<vmem>>, vector<1x128xf32>
    tpu.vector_store %arg4[%c0_23, %c0_24], %57 {strides = array<i32>} : memref<1x128xf32, #tpu.memory_space<vmem>>, vector<1x128xf32>,
    return
  }
  func.func @transform_0(%arg0: i32) -> (i32, i32) {
    %c0_i32 = arith.constant 0 : i32
    %c0_i32_0 = arith.constant 0 : i32
    return %arg0, %c0_i32 : i32, i32
  }
  func.func @transform_1(%arg0: i32) -> (i32, i32) {
    %c0_i32 = arith.constant 0 : i32
    %c0_i32_0 = arith.constant 0 : i32
    return %arg0, %c0_i32 : i32, i32
  }
  func.func @transform_2(%arg0: i32) -> (i32, i32) {
    %c0_i32 = arith.constant 0 : i32
    %c0_i32_0 = arith.constant 0 : i32
    return %arg0, %c0_i32 : i32, i32
  }
  func.func @transform_3(%arg0: i32) -> (i32, i32) {
    %c0_i32 = arith.constant 0 : i32
    %c0_i32_0 = arith.constant 0 : i32
    %c0_i32_1 = arith.constant 0 : i32
    return %c0_i32, %c0_i32_0 : i32, i32
  }
}

</mosaic_0001>

<llo_original>
// kernel: recon_loss.1
$region0: #{recon_loss.1}
  #allocation0 [shape = 'u32[]', space=smem, size = 0x4, offset = 0x4, fixed_abs, tag = 'smem constant byte address 0x4 - core index']
  #allocation1 [shape = 'u32[144,128]{1,0:T(1,128)}', space=vmem, size = 0x12000, scoped, tag = 'internal scratch']
  %s0 = inlined_call_operand.vmem [shape: f32[16,32], index: 0, kind: input, shape index: {}]
  %s1 = inlined_call_operand.vmem [shape: f32[16,32], index: 1, kind: input, shape index: {}]
  %s2 = inlined_call_operand.vmem [shape: f32[16,16], index: 2, kind: input, shape index: {}]
  %s3 = inlined_call_operand.hbm [shape: f32[1,128], index: 3, kind: output, shape index: {}]
  %s4 = sld [smem:[#allocation0]]
  $region26: #{recon_loss.1} parent=0
    _
  %s6 = ssub.s32 1, %s4
  %s7 = scalar_select 0, %s6, %s4
  $region1: #{recon_loss.1} parent=0
    #allocation2 [shape = 'u8[512]{0}', space=vmem, size = 0x400, scoped, tag = 'output window, operand 0, single buffered']
    #allocation3 [shape = 's32[1]{0}', space=sflag, size = 0x4, scoped, tag = 'scoped memory for recon_loss.1']
    %8 = vsyncpa [#allocation3], 0
    // Predicated region
    $region2: #{recon_loss.1} parent=1 // pred_check
      _
    $region3: #{recon_loss.1} parent=1 // pred_check_branch
      %10 = sbr.rel (0) target = $region5
    $region4: #{recon_loss.1} parent=1 // pred_region
      _
    $region5: #{recon_loss.1} parent=1 // pred_fallthru
      _
    // Predicated region
    $region6: #{recon_loss.1} parent=1 // pred_check
      _
    $region7: #{recon_loss.1} parent=1 // pred_check_branch
      %12 = sbr.rel (0) target = $region9
    $region8: #{recon_loss.1} parent=1 // pred_region
      _
    $region9: #{recon_loss.1} parent=1 // pred_fallthru
      _
    // Predicated region
    $region10: #{recon_loss.1} parent=1 // pred_check
      _
    $region11: #{recon_loss.1} parent=1 // pred_check_branch
      %14 = sbr.rel (0) target = $region13
    $region12: #{recon_loss.1} parent=1 // pred_region
      _
    $region13: #{recon_loss.1} parent=1 // pred_fallthru
      _
    %v15 = vld [vmem:[%s0] sm:$0xff]
    %v16 = vld [vmem:[%s0 + $0x8] sm:$0xff]
    %v17 = vld [vmem:[%s1] sm:$0xff]
    %v18 = vld [vmem:[%s1 + $0x8] sm:$0xff]
    %v19 = vmul.f32 %v15, %v17
    %v20 = vmul.f32 %v16, %v18
    %vm21 = vcmask 261120
    %v22 = vsel %vm21, %v19, 0.0
    %23 = vadd.xlane.f32.xlu0 %v22
    %v24 = vpop.xlane.xlu0 %23
    %v25 = vsel %vm21, %v20, 0.0
    %26 = vadd.xlane.f32.xlu0 %v25
    %v27 = vpop.xlane.xlu0 %26
    %v28 = vld [vmem:[%s2] sm:$0xff]
    %v29 = vld [vmem:[%s2 + $0x8] sm:$0xff]
    %v30 = vmul.f32 %v28, %v28
    %v31 = vmul.f32 %v29, %v29
    %vm32 = vcmask 130048
    %v33 = vsel %vm32, %v30, 0.0
    %34 = vadd.xlane.f32.xlu0 %v33
    %v35 = vpop.xlane.xlu0 %34
    %v36 = vsel %vm32, %v31, 0.0
    %37 = vadd.xlane.f32.xlu0 %v36
    %v38 = vpop.xlane.xlu0 %37
    %v39 = vadd.f32 %v24, %v35
    %v40 = vadd.f32 %v27, %v38
    %s41 = smul.u32 0, 16
    %v42 = vlaneseq
    %v43 = vshrl.u32 %v42, 7
    %v44 = vadd.s32 %v43, 8
    %v45 = vstv %s41
    %v46 = vadd.s32 %v45, %v43
    %v47 = vadd.s32 %v45, %v44
    %vm48 = vcmp.lt.s32.totalorder %v46, 8
    %vm49 = vcmp.lt.s32.totalorder %v47, 8
    %vm50 = vcmp.lt.s32.totalorder %v46, 16
    %vm51 = vcmp.lt.s32.totalorder %v47, 16
    %v52 = vsel %vm50, %v39, 0.0
    %v53 = vsel %vm51, %v40, 0.0
    %v54 = vsub.f32 0.0, %v52
    %v55 = vsub.f32 0.0, %v53
    %v56 = vsel %vm48, %v52, %v54
    %v57 = vsel %vm49, %v53, %v55
    %v58 = vand.u32 2147483647, %v56
    %v59 = vand.u32 2147483647, %v57
    %v60 = vsub.f32 0.0, %v58
    %v61 = vsub.f32 0.0, %v59
    %v62 = vmul.f32 %v60, 1.442695
    %v63 = vpow.pop %v62
    %v64 = vmul.f32 %v61, 1.442695
    %v65 = vpow.pop %v64
    %vm66 = vcmp.ge.f32.partialorder %v56, 0.0
    %vm67 = vcmp.ge.f32.partialorder %v57, 0.0
    %v68 = vadd.f32 %v63, 1.0
    %v69 = vadd.f32 %v65, 1.0
    %v70 = vrcp.pop %v68
    %v71 = vmul.f32 1.0, %v70
    %v72 = vrcp.pop %v69
    %v73 = vmul.f32 1.0, %v72
    %v74 = vmul.f32 %v63, %v70
    %v75 = vmul.f32 %v65, %v72
    %v76 = vsel %vm66, %v71, %v74
    %v77 = vsel %vm67, %v73, %v75
    %v78 = vadd.f32 %v76, 1e-15
    %v79 = vadd.f32 %v77, 1e-15
    %v80 = vlog2.pop %v78
    %v81 = vmul.f32 %v80, 0.6931472
    %v82 = vlog2.pop %v79
    %v83 = vmul.f32 %v82, 0.6931472
    %v84 = vsub.f32 0.0, %v81
    %v85 = vsub.f32 0.0, %v83
    %v86 = vsel %vm50, 0.125, 0.0
    %v87 = vsel %vm51, 0.125, 0.0
    %v88 = vmul.f32 %v84, %v86
    %v89 = vmul.f32 %v85, %v87
    %vm90 = vcmask 7168
    %v91 = vsel %vm90, %v88, 0.0
    %v92 = vsel %vm90, %v89, 0.0
    %v93 = vadd.f32 %v91, %v92
    %94 = vadd.xlane.f32.xlu0 %v93
    %v95 = vpop.xlane.xlu0 %94
    %v96 = vrot.slane %v95, 4
    %v97 = vadd.f32 %v95, %v96
    %v98 = vrot.slane %v97, 2
    %v99 = vadd.f32 %v97, %v98
    %v100 = vrot.slane %v99, 1
    %v101 = vadd.f32 %v99, %v100
    %s102 = vtos %v101
    %p103 = scmp.eq.s32.totalorder 0, 0
    // Predicated region
    $region14: #{recon_loss.1} parent=1 // pred_check
      %p104 = pneg %p103
    $region15: #{recon_loss.1} parent=1 // pred_check_branch
      %106 = sbr.rel (%p104) target = $region17
    $region16: #{recon_loss.1} parent=1 // pred_region
      %107 = vst [vmem:[#allocation2] sm:$0x1] 0.0
    $region17: #{recon_loss.1} parent=1 // pred_fallthru
      _
    %v108 = vld [vmem:[#allocation2] sm:$0x1]
    %v109 = vstv %s102
    %v110 = vadd.f32 %v108, %v109
    %111 = vst [vmem:[#allocation2] sm:$0x1] %v110
    // Predicated region
    $region18: #{recon_loss.1} parent=1 // pred_check
      _
    $region19: #{recon_loss.1} parent=1 // pred_check_branch
      %113 = sbr.rel (0) target = $region21
    $region20: #{recon_loss.1} parent=1 // pred_region
      %s115 = ssub.s32 16, 16
      %116 = vsyncadd [#allocation3], %s115
      %s118 = sshll.u32 [#allocation2], 4
      %s119 = int_to_ptr.vmem [resolvable:$true] %s118
      %121 = dma.vmem_to_hbm [thread:$0]  %s119, 16, %s3, [#allocation3]
    $region21: #{recon_loss.1} parent=1 // pred_fallthru
      _
    // Predicated region
    $region22: #{recon_loss.1} parent=1 // pred_check
      _
    $region23: #{recon_loss.1} parent=1 // pred_check_branch
      %123 = sbr.rel (0) target = $region25
    $region24: #{recon_loss.1} parent=1 // pred_region
      %124 = dma.done [#allocation3], 16
    $region25: #{recon_loss.1} parent=1 // pred_fallthru
      _
    %125 = vsyncpa [#allocation3], 1

</llo_original>
